<compile_context>
chip_gen: v6e
topology: v6e:2x2x1
jax: 0.10.0
libtpu: 0.0.40
codegen_flags: <defaults>
</compile_context>

<pallas_src>
import jax
import jax.numpy as jnp
from jax.experimental import pallas as pl
from jax.experimental.pallas import tpu as pltpu


_BN_EPS = 1e-5
_LANE = 128


def _make_kernel(num_hidden):
    """Build the fused-MLP kernel for `num_hidden` (Linear+BN+ReLU) blocks + final Linear+ReLU."""

    def kernel(*refs):
        # refs layout:
        #   x_ref,
        #   (w_i, g_i, be_i) * num_hidden,          # hidden layers (bias dropped: BN cancels it)
        #   w_last, b_last,                          # final (lane-padded) linear
        #   out_ref                                  # [B, padded_out] lane-dense output slab
        x_ref = refs[0]
        out_ref = refs[-1]

        h = x_ref[...]  # already f32 from the wrapper; no redundant cast
        idx = 1
        for _ in range(num_hidden):
            w_ref, g_ref, be_ref = refs[idx], refs[idx + 1], refs[idx + 2]
            idx += 3

            # Linear (bias omitted: cancelled by the BN mean subtraction below).
            z = jnp.dot(h, w_ref[...], preferred_element_type=jnp.float32)

            # Training-mode BatchNorm1d, folded into a single per-feature scale row.
            mean = jnp.mean(z, axis=0, keepdims=True)                  # [1, out]
            centered = z - mean
            var = jnp.mean(centered * centered, axis=0, keepdims=True) # biased variance
            scale = g_ref[...] * jax.lax.rsqrt(var + _BN_EPS)          # [1, out]
            h = jnp.maximum(centered * scale + be_ref[...], 0.0)       # BN + ReLU

            # TODO(synk): nn.Dropout(0.3) is stochastic; treated as identity (eval semantics).

        # Final Linear (+ bias) + the unconditional trailing ReLU, written lane-dense.
        w_ref, b_ref = refs[idx], refs[idx + 1]
        z = jnp.dot(h, w_ref[...], preferred_element_type=jnp.float32) + b_ref[...]
        out_ref[...] = jnp.maximum(z, 0.0).astype(out_ref.dtype)

    return kernel


def it_direct_predict_mlp_forward(x, params, layer_sizes):
    """Full forward pass of It_Direct_Predict_MLP (final_relu=False) in one Pallas call.

    x: [B, layer_sizes[0]] float32
    params: dict with w1..wL ([in,out]), b1..bL ([out]), g1..g(L-1), be1..be(L-1).
    Returns the final output with trailing size-1 dim squeezed (matches .squeeze(1)).
    """
    num_layers = len(layer_sizes) - 1
    num_hidden = num_layers - 1
    B = x.shape[0]
    d_out = int(layer_sizes[-1])
    d_in_last = int(layer_sizes[-2])

    def row(v):  # [n] -> [1, n] so it broadcasts along sublanes inside the kernel
        return v.reshape(1, -1).astype(jnp.float32)

    # Zero-pad the final linear to a lane-dense width (multiple of 128) so the single
    # HBM output store is an unmasked full-lane store.
    padded_out = max(_LANE, ((d_out + _LANE - 1) // _LANE) * _LANE)
    w_last = params[f"w{num_layers}"].astype(jnp.float32)
    b_last = params[f"b{num_layers}"].astype(jnp.float32)
    if padded_out != d_out:
        w_pad = jnp.zeros((d_in_last, padded_out), jnp.float32).at[:, :d_out].set(w_last)
        b_pad = jnp.zeros((padded_out,), jnp.float32).at[:d_out].set(b_last)
    else:
        w_pad, b_pad = w_last, b_last

    inputs = [x.astype(jnp.float32)]
    for i in range(1, num_hidden + 1):
        # NOTE: b{i} deliberately not passed — cancelled by training-mode BN.
        inputs += [params[f"w{i}"].astype(jnp.float32),
                   row(params[f"g{i}"]),
                   row(params[f"be{i}"])]
    inputs += [w_pad, row(b_pad)]

    vmem_spec = pl.BlockSpec(memory_space=pltpu.MemorySpace.VMEM)

    out_slab = pl.pallas_call(
        _make_kernel(num_hidden),
        out_shape=jax.ShapeDtypeStruct((B, padded_out), jnp.float32),
        in_specs=[vmem_spec] * len(inputs),
        out_specs=vmem_spec,
    )(*inputs)

    o = out_slab[:, :d_out]
    if d_out == 1:          # mirrors torch's .squeeze(1)
        o = o[:, 0]
    return o


def init_params(key, layer_sizes):
    """Mirrors It_Direct_Predict_MLP._init_weights: Linear weights ~ N(0, 0.01),
    biases ~ U(-0.1, 0.1); BatchNorm gamma=1, beta=0.  Weights stored as [in, out]."""
    num_layers = len(layer_sizes) - 1
    keys = jax.random.split(key, 2 * num_layers)
    params = {}
    for i in range(num_layers):
        fan_in, fan_out = layer_sizes[i], layer_sizes[i + 1]
        params[f"w{i+1}"] = 0.01 * jax.random.normal(
            keys[2 * i], (fan_in, fan_out), dtype=jnp.float32)
        params[f"b{i+1}"] = jax.random.uniform(
            keys[2 * i + 1], (fan_out,), minval=-0.1, maxval=0.1, dtype=jnp.float32)
    for i in range(num_layers - 1):  # BN for every hidden layer
        params[f"g{i+1}"] = jnp.ones((layer_sizes[i + 1],), jnp.float32)
        params[f"be{i+1}"] = jnp.zeros((layer_sizes[i + 1],), jnp.float32)
    return params


def _reference_forward(x, params, layer_sizes):
    """Pure-JAX reference with the ORIGINAL semantics (hidden biases included,
    training-mode BN, dropout as identity, final ReLU, squeeze(1))."""
    num_layers = len(layer_sizes) - 1
    h = x
    for i in range(1, num_layers):
        z = h @ params[f"w{i}"] + params[f"b{i}"]
        mean = jnp.mean(z, axis=0, keepdims=True)
        var = jnp.mean((z - mean) ** 2, axis=0, keepdims=True)
        z = params[f"g{i}"] * (z - mean) / jnp.sqrt(var + _BN_EPS) + params[f"be{i}"]
        h = jax.nn.relu(z)
    o = jax.nn.relu(h @ params[f"w{num_layers}"] + params[f"b{num_layers}"])
    if o.shape[1] == 1:
        o = o[:, 0]
    return o


if __name__ == "__main__":
    # Small shapes consistent with the module: final width 1 so forward's .squeeze(1)
    # produces a [B] vector of predicted performance values.
    layer_sizes = (32, 64, 48, 32, 1)
    batch = 8

    key = jax.random.PRNGKey(0)
    k_x, k_p = jax.random.split(key)
    x = jax.random.normal(k_x, (batch, layer_sizes[0]), dtype=jnp.float32)
    params = init_params(k_p, layer_sizes)

    out = it_direct_predict_mlp_forward(x, params, layer_sizes)
    out = jax.block_until_ready(out)

    ref = _reference_forward(x, params, layer_sizes)
    assert out.shape == ref.shape and out.dtype == ref.dtype
    assert jnp.max(jnp.abs(out - ref)) < 1e-4, "mismatch vs reference"

    print("KERNEL_OK")
</pallas_src>

<mosaic_0001>
module attributes {stable_mosaic.version = 11 : i64} {
  func.func @kernel(%arg0: memref<8x32xf32, #tpu.memory_space<vmem>>, %arg1: memref<32x64xf32, #tpu.memory_space<vmem>>, %arg2: memref<1x64xf32, #tpu.memory_space<vmem>>, %arg3: memref<1x64xf32, #tpu.memory_space<vmem>>, %arg4: memref<64x48xf32, #tpu.memory_space<vmem>>, %arg5: memref<1x48xf32, #tpu.memory_space<vmem>>, %arg6: memref<1x48xf32, #tpu.memory_space<vmem>>, %arg7: memref<48x32xf32, #tpu.memory_space<vmem>>, %arg8: memref<1x32xf32, #tpu.memory_space<vmem>>, %arg9: memref<1x32xf32, #tpu.memory_space<vmem>>, %arg10: memref<32x128xf32, #tpu.memory_space<vmem>>, %arg11: memref<1x128xf32, #tpu.memory_space<vmem>>, %arg12: memref<8x128xf32, #tpu.memory_space<vmem>>) attributes {dimension_semantics = [], scalar_prefetch = 0 : i64, scratch_operands = 0 : i64, tpu.core_type = #tpu.core_type<tc>} {
    %c0 = arith.constant 0 : index
    %c0_0 = arith.constant 0 : index
    %0 = vector.load %arg0[%c0, %c0_0] : memref<8x32xf32, #tpu.memory_space<vmem>>, vector<8x32xf32>
    %c0_1 = arith.constant 0 : index
    %c0_2 = arith.constant 0 : index
    %1 = vector.load %arg1[%c0_1, %c0_2] : memref<32x64xf32, #tpu.memory_space<vmem>>, vector<32x64xf32>
    %cst = arith.constant dense<0.000000e+00> : vector<8x64xf32>
    %2 = tpu.matmul %0, %1, %cst {dimension_numbers = #tpu.dot_dimension_numbers<[1], [0], [0], [1], [0, 0, 1, 1], [], []>} : vector<8x32xf32>, vector<32x64xf32>, vector<8x64xf32> -> vector<8x64xf32>
    %cst_3 = arith.constant dense<0.000000e+00> : vector<64xf32>
    %3 = vector.multi_reduction <add>, %2, %cst_3 [0] : vector<8x64xf32> to vector<64xf32>
    %4 = vector.shape_cast %3 : vector<64xf32> to vector<1x64xf32>
    %cst_4 = arith.constant 8.000000e+00 : f32
    %5 = vector.broadcast %cst_4 : f32 to vector<1x64xf32>
    %6 = arith.divf %4, %5 : vector<1x64xf32>
    %7 = vector.broadcast %6 : vector<1x64xf32> to vector<8x64xf32>
    %8 = arith.subf %2, %7 : vector<8x64xf32>
    %9 = arith.mulf %8, %8 : vector<8x64xf32>
    %cst_5 = arith.constant dense<0.000000e+00> : vector<64xf32>
    %10 = vector.multi_reduction <add>, %9, %cst_5 [0] : vector<8x64xf32> to vector<64xf32>
    %11 = vector.shape_cast %10 : vector<64xf32> to vector<1x64xf32>
    %cst_6 = arith.constant 8.000000e+00 : f32
    %12 = vector.broadcast %cst_6 : f32 to vector<1x64xf32>
    %13 = arith.divf %11, %12 : vector<1x64xf32>
    %c0_7 = arith.constant 0 : index
    %c0_8 = arith.constant 0 : index
    %14 = vector.load %arg2[%c0_7, %c0_8] : memref<1x64xf32, #tpu.memory_space<vmem>>, vector<1x64xf32>
    %cst_9 = arith.constant 9.99999974E-6 : f32
    %15 = vector.broadcast %cst_9 : f32 to vector<1x64xf32>
    %16 = arith.addf %13, %15 : vector<1x64xf32>
    %17 = math.rsqrt %16 : vector<1x64xf32>
    %18 = arith.mulf %14, %17 : vector<1x64xf32>
    %19 = vector.broadcast %18 : vector<1x64xf32> to vector<8x64xf32>
    %20 = arith.mulf %8, %19 : vector<8x64xf32>
    %c0_10 = arith.constant 0 : index
    %c0_11 = arith.constant 0 : index
    %21 = vector.load %arg3[%c0_10, %c0_11] : memref<1x64xf32, #tpu.memory_space<vmem>>, vector<1x64xf32>
    %22 = vector.broadcast %21 : vector<1x64xf32> to vector<8x64xf32>
    %23 = arith.addf %20, %22 : vector<8x64xf32>
    %cst_12 = arith.constant 0.000000e+00 : f32
    %24 = vector.broadcast %cst_12 : f32 to vector<8x64xf32>
    %25 = arith.maximumf %23, %24 : vector<8x64xf32>
    %c0_13 = arith.constant 0 : index
    %c0_14 = arith.constant 0 : index
    %26 = vector.load %arg4[%c0_13, %c0_14] : memref<64x48xf32, #tpu.memory_space<vmem>>, vector<64x48xf32>
    %cst_15 = arith.constant dense<0.000000e+00> : vector<8x48xf32>
    %27 = tpu.matmul %25, %26, %cst_15 {dimension_numbers = #tpu.dot_dimension_numbers<[1], [0], [0], [1], [0, 0, 1, 1], [], []>} : vector<8x64xf32>, vector<64x48xf32>, vector<8x48xf32> -> vector<8x48xf32>
    %cst_16 = arith.constant dense<0.000000e+00> : vector<48xf32>
    %28 = vector.multi_reduction <add>, %27, %cst_16 [0] : vector<8x48xf32> to vector<48xf32>
    %29 = vector.shape_cast %28 : vector<48xf32> to vector<1x48xf32>
    %cst_17 = arith.constant 8.000000e+00 : f32
    %30 = vector.broadcast %cst_17 : f32 to vector<1x48xf32>
    %31 = arith.divf %29, %30 : vector<1x48xf32>
    %32 = vector.broadcast %31 : vector<1x48xf32> to vector<8x48xf32>
    %33 = arith.subf %27, %32 : vector<8x48xf32>
    %34 = arith.mulf %33, %33 : vector<8x48xf32>
    %cst_18 = arith.constant dense<0.000000e+00> : vector<48xf32>
    %35 = vector.multi_reduction <add>, %34, %cst_18 [0] : vector<8x48xf32> to vector<48xf32>
    %36 = vector.shape_cast %35 : vector<48xf32> to vector<1x48xf32>
    %cst_19 = arith.constant 8.000000e+00 : f32
    %37 = vector.broadcast %cst_19 : f32 to vector<1x48xf32>
    %38 = arith.divf %36, %37 : vector<1x48xf32>
    %c0_20 = arith.constant 0 : index
    %c0_21 = arith.constant 0 : index
    %39 = vector.load %arg5[%c0_20, %c0_21] : memref<1x48xf32, #tpu.memory_space<vmem>>, vector<1x48xf32>
    %cst_22 = arith.constant 9.99999974E-6 : f32
    %40 = vector.broadcast %cst_22 : f32 to vector<1x48xf32>
    %41 = arith.addf %38, %40 : vector<1x48xf32>
    %42 = math.rsqrt %41 : vector<1x48xf32>
    %43 = arith.mulf %39, %42 : vector<1x48xf32>
    %44 = vector.broadcast %43 : vector<1x48xf32> to vector<8x48xf32>
    %45 = arith.mulf %33, %44 : vector<8x48xf32>
    %c0_23 = arith.constant 0 : index
    %c0_24 = arith.constant 0 : index
    %46 = vector.load %arg6[%c0_23, %c0_24] : memref<1x48xf32, #tpu.memory_space<vmem>>, vector<1x48xf32>
    %47 = vector.broadcast %46 : vector<1x48xf32> to vector<8x48xf32>
    %48 = arith.addf %45, %47 : vector<8x48xf32>
    %cst_25 = arith.constant 0.000000e+00 : f32
    %49 = vector.broadcast %cst_25 : f32 to vector<8x48xf32>
    %50 = arith.maximumf %48, %49 : vector<8x48xf32>
    %c0_26 = arith.constant 0 : index
    %c0_27 = arith.constant 0 : index
    %51 = vector.load %arg7[%c0_26, %c0_27] : memref<48x32xf32, #tpu.memory_space<vmem>>, vector<48x32xf32>
    %cst_28 = arith.constant dense<0.000000e+00> : vector<8x32xf32>
    %52 = tpu.matmul %50, %51, %cst_28 {dimension_numbers = #tpu.dot_dimension_numbers<[1], [0], [0], [1], [0, 0, 1, 1], [], []>} : vector<8x48xf32>, vector<48x32xf32>, vector<8x32xf32> -> vector<8x32xf32>
    %cst_29 = arith.constant dense<0.000000e+00> : vector<32xf32>
    %53 = vector.multi_reduction <add>, %52, %cst_29 [0] : vector<8x32xf32> to vector<32xf32>
    %54 = vector.shape_cast %53 : vector<32xf32> to vector<1x32xf32>
    %cst_30 = arith.constant 8.000000e+00 : f32
    %55 = vector.broadcast %cst_30 : f32 to vector<1x32xf32>
    %56 = arith.divf %54, %55 : vector<1x32xf32>
    %57 = vector.broadcast %56 : vector<1x32xf32> to vector<8x32xf32>
    %58 = arith.subf %52, %57 : vector<8x32xf32>
    %59 = arith.mulf %58, %58 : vector<8x32xf32>
    %cst_31 = arith.constant dense<0.000000e+00> : vector<32xf32>
    %60 = vector.multi_reduction <add>, %59, %cst_31 [0] : vector<8x32xf32> to vector<32xf32>
    %61 = vector.shape_cast %60 : vector<32xf32> to vector<1x32xf32>
    %cst_32 = arith.constant 8.000000e+00 : f32
    %62 = vector.broadcast %cst_32 : f32 to vector<1x32xf32>
    %63 = arith.divf %61, %62 : vector<1x32xf32>
    %c0_33 = arith.constant 0 : index
    %c0_34 = arith.constant 0 : index
    %64 = vector.load %arg8[%c0_33, %c0_34] : memref<1x32xf32, #tpu.memory_space<vmem>>, vector<1x32xf32>
    %cst_35 = arith.constant 9.99999974E-6 : f32
    %65 = vector.broadcast %cst_35 : f32 to vector<1x32xf32>
    %66 = arith.addf %63, %65 : vector<1x32xf32>
    %67 = math.rsqrt %66 : vector<1x32xf32>
    %68 = arith.mulf %64, %67 : vector<1x32xf32>
    %69 = vector.broadcast %68 : vector<1x32xf32> to vector<8x32xf32>
    %70 = arith.mulf %58, %69 : vector<8x32xf32>
    %c0_36 = arith.constant 0 : index
    %c0_37 = arith.constant 0 : index
    %71 = vector.load %arg9[%c0_36, %c0_37] : memref<1x32xf32, #tpu.memory_space<vmem>>, vector<1x32xf32>
    %72 = vector.broadcast %71 : vector<1x32xf32> to vector<8x32xf32>
    %73 = arith.addf %70, %72 : vector<8x32xf32>
    %cst_38 = arith.constant 0.000000e+00 : f32
    %74 = vector.broadcast %cst_38 : f32 to vector<8x32xf32>
    %75 = arith.maximumf %73, %74 : vector<8x32xf32>
    %c0_39 = arith.constant 0 : index
    %c0_40 = arith.constant 0 : index
    %76 = vector.load %arg10[%c0_39, %c0_40] : memref<32x128xf32, #tpu.memory_space<vmem>>, vector<32x128xf32>
    %cst_41 = arith.constant dense<0.000000e+00> : vector<8x128xf32>
    %77 = tpu.matmul %75, %76, %cst_41 {dimension_numbers = #tpu.dot_dimension_numbers<[1], [0], [0], [1], [0, 0, 1, 1], [], []>} : vector<8x32xf32>, vector<32x128xf32>, vector<8x128xf32> -> vector<8x128xf32>
    %c0_42 = arith.constant 0 : index
    %c0_43 = arith.constant 0 : index
    %78 = vector.load %arg11[%c0_42, %c0_43] : memref<1x128xf32, #tpu.memory_space<vmem>>, vector<1x128xf32>
    %79 = vector.broadcast %78 : vector<1x128xf32> to vector<8x128xf32>
    %80 = arith.addf %77, %79 : vector<8x128xf32>
    %cst_44 = arith.constant 0.000000e+00 : f32
    %81 = vector.broadcast %cst_44 : f32 to vector<8x128xf32>
    %82 = arith.maximumf %80, %81 : vector<8x128xf32>
    %c0_45 = arith.constant 0 : index
    %c0_46 = arith.constant 0 : index
    %83 = vector.load %arg12[%c0_45, %c0_46] : memref<8x128xf32, #tpu.memory_space<vmem>>, vector<8x128xf32>
    tpu.vector_store %arg12[%c0_45, %c0_46], %82 {strides = array<i32>} : memref<8x128xf32, #tpu.memory_space<vmem>>, vector<8x128xf32>,
    return
  }
}

</mosaic_0001>

<llo_original>
// kernel: tpu_custom_call.1
$region0: #{tpu_custom_call.1}
  #allocation0 [shape = 'u32[]', space=smem, size = 0x4, offset = 0x4, fixed_abs, tag = 'smem constant byte address 0x4 - core index']
  #allocation1 [shape = 'u32[144,128]{1,0:T(1,128)}', space=vmem, size = 0x12000, scoped, tag = 'internal scratch']
  %s0 = inlined_call_operand.vmem [shape: f32[8,32], index: 0, kind: input, shape index: {}]
  %s1 = inlined_call_operand.vmem [shape: f32[32,64], index: 1, kind: input, shape index: {}]
  %s2 = inlined_call_operand.vmem [shape: f32[1,64], index: 2, kind: input, shape index: {}]
  %s3 = inlined_call_operand.vmem [shape: f32[1,64], index: 3, kind: input, shape index: {}]
  %s4 = inlined_call_operand.vmem [shape: f32[64,48], index: 4, kind: input, shape index: {}]
  %s5 = inlined_call_operand.vmem [shape: f32[1,48], index: 5, kind: input, shape index: {}]
  %s6 = inlined_call_operand.vmem [shape: f32[1,48], index: 6, kind: input, shape index: {}]
  %s7 = inlined_call_operand.vmem [shape: f32[48,32], index: 7, kind: input, shape index: {}]
  %s8 = inlined_call_operand.vmem [shape: f32[1,32], index: 8, kind: input, shape index: {}]
  %s9 = inlined_call_operand.vmem [shape: f32[1,32], index: 9, kind: input, shape index: {}]
  %s10 = inlined_call_operand.vmem [shape: f32[32,128], index: 10, kind: input, shape index: {}]
  %s11 = inlined_call_operand.vmem [shape: f32[1,128], index: 11, kind: input, shape index: {}]
  %s12 = inlined_call_operand.hbm [shape: f32[8,128], index: 12, kind: output, shape index: {}]
  %s13 = sld [smem:[#allocation0]]
  $region58: #{tpu_custom_call.1} parent=0
    _
  %s15 = ssub.s32 1, %s13
  %s16 = scalar_select 0, %s15, %s13
  $region1: #{tpu_custom_call.1} parent=0
    #allocation2 [shape = 'u8[4096]{0}', space=vmem, size = 0x1000, scoped, tag = 'output window, operand 0, single buffered']
    #allocation3 [shape = 's32[1]{0}', space=sflag, size = 0x4, scoped, tag = 'scoped memory for tpu_custom_call.1']
    %17 = vsyncpa [#allocation3], 0
    // Predicated region
    $region2: #{tpu_custom_call.1} parent=1 // pred_check
      _
    $region3: #{tpu_custom_call.1} parent=1 // pred_check_branch
      %19 = sbr.rel (0) target = $region5
    $region4: #{tpu_custom_call.1} parent=1 // pred_region
      _
    $region5: #{tpu_custom_call.1} parent=1 // pred_fallthru
      _
    // Predicated region
    $region6: #{tpu_custom_call.1} parent=1 // pred_check
      _
    $region7: #{tpu_custom_call.1} parent=1 // pred_check_branch
      %21 = sbr.rel (0) target = $region9
    $region8: #{tpu_custom_call.1} parent=1 // pred_region
      _
    $region9: #{tpu_custom_call.1} parent=1 // pred_fallthru
      _
    // Predicated region
    $region10: #{tpu_custom_call.1} parent=1 // pred_check
      _
    $region11: #{tpu_custom_call.1} parent=1 // pred_check_branch
      %23 = sbr.rel (0) target = $region13
    $region12: #{tpu_custom_call.1} parent=1 // pred_region
      _
    $region13: #{tpu_custom_call.1} parent=1 // pred_fallthru
      _
    // Predicated region
    $region14: #{tpu_custom_call.1} parent=1 // pred_check
      _
    $region15: #{tpu_custom_call.1} parent=1 // pred_check_branch
      %25 = sbr.rel (0) target = $region17
    $region16: #{tpu_custom_call.1} parent=1 // pred_region
      _
    $region17: #{tpu_custom_call.1} parent=1 // pred_fallthru
      _
    // Predicated region
    $region18: #{tpu_custom_call.1} parent=1 // pred_check
      _
    $region19: #{tpu_custom_call.1} parent=1 // pred_check_branch
      %27 = sbr.rel (0) target = $region21
    $region20: #{tpu_custom_call.1} parent=1 // pred_region
      _
    $region21: #{tpu_custom_call.1} parent=1 // pred_fallthru
      _
    // Predicated region
    $region22: #{tpu_custom_call.1} parent=1 // pred_check
      _
    $region23: #{tpu_custom_call.1} parent=1 // pred_check_branch
      %29 = sbr.rel (0) target = $region25
    $region24: #{tpu_custom_call.1} parent=1 // pred_region
      _
    $region25: #{tpu_custom_call.1} parent=1 // pred_fallthru
      _
    // Predicated region
    $region26: #{tpu_custom_call.1} parent=1 // pred_check
      _
    $region27: #{tpu_custom_call.1} parent=1 // pred_check_branch
      %31 = sbr.rel (0) target = $region29
    $region28: #{tpu_custom_call.1} parent=1 // pred_region
      _
    $region29: #{tpu_custom_call.1} parent=1 // pred_fallthru
      _
    // Predicated region
    $region30: #{tpu_custom_call.1} parent=1 // pred_check
      _
    $region31: #{tpu_custom_call.1} parent=1 // pred_check_branch
      %33 = sbr.rel (0) target = $region33
    $region32: #{tpu_custom_call.1} parent=1 // pred_region
      _
    $region33: #{tpu_custom_call.1} parent=1 // pred_fallthru
      _
    // Predicated region
    $region34: #{tpu_custom_call.1} parent=1 // pred_check
      _
    $region35: #{tpu_custom_call.1} parent=1 // pred_check_branch
      %35 = sbr.rel (0) target = $region37
    $region36: #{tpu_custom_call.1} parent=1 // pred_region
      _
    $region37: #{tpu_custom_call.1} parent=1 // pred_fallthru
      _
    // Predicated region
    $region38: #{tpu_custom_call.1} parent=1 // pred_check
      _
    $region39: #{tpu_custom_call.1} parent=1 // pred_check_branch
      %37 = sbr.rel (0) target = $region41
    $region40: #{tpu_custom_call.1} parent=1 // pred_region
      _
    $region41: #{tpu_custom_call.1} parent=1 // pred_fallthru
      _
    // Predicated region
    $region42: #{tpu_custom_call.1} parent=1 // pred_check
      _
    $region43: #{tpu_custom_call.1} parent=1 // pred_check_branch
      %39 = sbr.rel (0) target = $region45
    $region44: #{tpu_custom_call.1} parent=1 // pred_region
      _
    $region45: #{tpu_custom_call.1} parent=1 // pred_fallthru
      _
    // Predicated region
    $region46: #{tpu_custom_call.1} parent=1 // pred_check
      _
    $region47: #{tpu_custom_call.1} parent=1 // pred_check_branch
      %41 = sbr.rel (0) target = $region49
    $region48: #{tpu_custom_call.1} parent=1 // pred_region
      _
    $region49: #{tpu_custom_call.1} parent=1 // pred_fallthru
      _
    %v42 = vld [vmem:[%s0] sm:$0xff]
    %v43 = vld [vmem:[%s1] sm:$0xff]
    %v44 = vld [vmem:[%s1 + $0x8] sm:$0xff]
    %v45 = vld [vmem:[%s1 + $0x10] sm:$0xff]
    %v46 = vld [vmem:[%s1 + $0x18] sm:$0xff]
    %vm47 = vcmask 261120
    %v49 = vsel %vm47, %v42, 0
    %51 = vmatprep.subr.mxu0 0.0
    %52 = vmatpush1.msra.mxu0 0.0
    %53 = vmatprep.subr.mxu0 0.0
    %54 = vmatpush1.msra.mxu0 0.0
    %55 = vmatprep.subr.mxu0 0.0
    %56 = vmatpush1.msra.mxu0 0.0
    %57 = vmatprep.subr.mxu0 0.0
    %58 = vmatpush1.msra.mxu0 0.0
    %59 = vmatprep.subr.mxu0 0.0
    %60 = vmatpush1.msra.mxu0 0.0
    %61 = vmatprep.subr.mxu0 0.0
    %62 = vmatpush1.msra.mxu0 0.0
    %63 = vmatprep.subr.mxu0 0.0
    %64 = vmatpush1.msra.mxu0 0.0
    %65 = vmatprep.subr.mxu0 0.0
    %66 = vmatpush1.msra.mxu0 0.0
    %67 = vmatprep.subr.mxu0 0.0
    %68 = vmatpush1.msra.mxu0 0.0
    %69 = vmatprep.subr.mxu0 0.0
    %70 = vmatpush1.msra.mxu0 0.0
    %71 = vmatprep.subr.mxu0 0.0
    %72 = vmatpush1.msra.mxu0 0.0
    %73 = vmatprep.subr.mxu0 0.0
    %74 = vmatpush1.msra.mxu0 0.0
    %75 = vmatprep.subr.mxu0 0.0
    %76 = vmatpush1.msra.mxu0 %v46
    %77 = vmatprep.subr.mxu0 0.0
    %78 = vmatpush1.msra.mxu0 %v45
    %79 = vmatprep.subr.mxu0 0.0
    %80 = vmatpush1.msra.mxu0 %v44
    %81 = vmatprep.subr.mxu0 0.0
    %82 = vmatpush1.msra.mxu0 %v43
    %83 = vmatprep.subr.mxu0 0.0
    %84 = vmatpush2.msra.mxu0 0.0
    %85 = vmatprep.subr.mxu0 0.0
    %86 = vmatpush2.msra.mxu0 0.0
    %87 = vmatprep.subr.mxu0 0.0
    %88 = vmatpush2.msra.mxu0 0.0
    %89 = vmatprep.subr.mxu0 0.0
    %90 = vmatpush2.msra.mxu0 0.0
    %91 = vmatprep.subr.mxu0 0.0
    %92 = vmatpush2.msra.mxu0 0.0
    %93 = vmatprep.subr.mxu0 0.0
    %94 = vmatpush2.msra.mxu0 0.0
    %95 = vmatprep.subr.mxu0 0.0
    %96 = vmatpush2.msra.mxu0 0.0
    %97 = vmatprep.subr.mxu0 0.0
    %98 = vmatpush2.msra.mxu0 0.0
    %99 = vmatprep.subr.mxu0 0.0
    %100 = vmatpush2.msra.mxu0 0.0
    %101 = vmatprep.subr.mxu0 0.0
    %102 = vmatpush2.msra.mxu0 0.0
    %103 = vmatprep.subr.mxu0 0.0
    %104 = vmatpush2.msra.mxu0 0.0
    %105 = vmatprep.subr.mxu0 0.0
    %106 = vmatpush2.msra.mxu0 0.0
    %107 = vmatprep.subr.mxu0 0.0
    %108 = vmatpush2.msra.mxu0 0.0
    %109 = vmatprep.subr.mxu0 0.0
    %110 = vmatpush2.msra.mxu0 0.0
    %111 = vmatprep.subr.mxu0 0.0
    %112 = vmatpush2.msra.mxu0 0.0
    %113 = vmatprep.subr.mxu0 0.0
    %114 = vmatpush2.msra.mxu0 0.0
    %115 = vmatprep.mubr.f32.mxu0 0.0
    %116 = vmatmul.mubr.f32.gmra.mxu0 %v49
    %v117 = vpop.f32.mrf.mxu0
    %v118 = vadd.f32 0.0, %v117
    %v119 = vpop.f32.mrf.mxu0
    %120 = vdwg.mxu0
    %vm121 = vcmask 523264
    %v122 = vsel %vm121, %v118, 0.0
    %v123 = vrot.slane %v122, 4
    %v124 = vadd.f32 %v122, %v123
    %v125 = vrot.slane %v124, 2
    %v126 = vadd.f32 %v124, %v125
    %v127 = vrot.slane %v126, 1
    %v128 = vadd.f32 %v126, %v127
    %v129 = vrcp.pop 8.0
    %v130 = vmul.f32 %v128, %v129
    %v131 = vsub.f32 %v118, %v130
    %v132 = vmul.f32 %v131, %v131
    %v133 = vsel %vm121, %v132, 0.0
    %v134 = vrot.slane %v133, 4
    %v135 = vadd.f32 %v133, %v134
    %v136 = vrot.slane %v135, 2
    %v137 = vadd.f32 %v135, %v136
    %v138 = vrot.slane %v137, 1
    %v139 = vadd.f32 %v137, %v138
    %v140 = vmul.f32 %v139, %v129
    %v141 = vld [vmem:[%s2] sm:$0x1]
    %v142 = vadd.f32 %v140, 1e-05
    %v143 = vrsqrt.pop %v142
    %v144 = vmul.f32 %v141, %v143
    %v146 = vlaneseq
    %v147 = vshrl.u32 %v146, 7
    %v148 = vsub.s32 0, %v147
    %v149 = vrot.slane %v144, %v148
    %v151 = vmul.f32 %v131, %v149
    %v152 = vld [vmem:[%s3] sm:$0x1]
    %v154 = vlaneseq
    %v155 = vshrl.u32 %v154, 7
    %v156 = vsub.s32 0, %v155
    %v157 = vrot.slane %v152, %v156
    %v159 = vadd.f32 %v151, %v157
    %v160 = vmax.f32 %v159, 0.0
    %v161 = vld [vmem:[%s4] sm:$0xff]
    %v162 = vld [vmem:[%s4 + $0x8] sm:$0xff]
    %v163 = vld [vmem:[%s4 + $0x10] sm:$0xff]
    %v164 = vld [vmem:[%s4 + $0x18] sm:$0xff]
    %v165 = vld [vmem:[%s4 + $0x20] sm:$0xff]
    %v166 = vld [vmem:[%s4 + $0x28] sm:$0xff]
    %v167 = vld [vmem:[%s4 + $0x30] sm:$0xff]
    %v168 = vld [vmem:[%s4 + $0x38] sm:$0xff]
    %v170 = vsel %vm121, %v160, 0
    %172 = vmatprep.subr.mxu0 0.0
    %173 = vmatpush1.msra.mxu0 0.0
    %174 = vmatprep.subr.mxu0 0.0
    %175 = vmatpush1.msra.mxu0 0.0
    %176 = vmatprep.subr.mxu0 0.0
    %177 = vmatpush1.msra.mxu0 0.0
    %178 = vmatprep.subr.mxu0 0.0
    %179 = vmatpush1.msra.mxu0 0.0
    %180 = vmatprep.subr.mxu0 0.0
    %181 = vmatpush1.msra.mxu0 0.0
    %182 = vmatprep.subr.mxu0 0.0
    %183 = vmatpush1.msra.mxu0 0.0
    %184 = vmatprep.subr.mxu0 0.0
    %185 = vmatpush1.msra.mxu0 0.0
    %186 = vmatprep.subr.mxu0 0.0
    %187 = vmatpush1.msra.mxu0 0.0
    %188 = vmatprep.subr.mxu0 0.0
    %189 = vmatpush1.msra.mxu0 %v168
    %190 = vmatprep.subr.mxu0 0.0
    %191 = vmatpush1.msra.mxu0 %v167
    %192 = vmatprep.subr.mxu0 0.0
    %193 = vmatpush1.msra.mxu0 %v166
    %194 = vmatprep.subr.mxu0 0.0
    %195 = vmatpush1.msra.mxu0 %v165
    %196 = vmatprep.subr.mxu0 0.0
    %197 = vmatpush1.msra.mxu0 %v164
    %198 = vmatprep.subr.mxu0 0.0
    %199 = vmatpush1.msra.mxu0 %v163
    %200 = vmatprep.subr.mxu0 0.0
    %201 = vmatpush1.msra.mxu0 %v162
    %202 = vmatprep.subr.mxu0 0.0
    %203 = vmatpush1.msra.mxu0 %v161
    %204 = vmatprep.subr.mxu0 0.0
    %205 = vmatpush2.msra.mxu0 0.0
    %206 = vmatprep.subr.mxu0 0.0
    %207 = vmatpush2.msra.mxu0 0.0
    %208 = vmatprep.subr.mxu0 0.0
    %209 = vmatpush2.msra.mxu0 0.0
    %210 = vmatprep.subr.mxu0 0.0
    %211 = vmatpush2.msra.mxu0 0.0
    %212 = vmatprep.subr.mxu0 0.0
    %213 = vmatpush2.msra.mxu0 0.0
    %214 = vmatprep.subr.mxu0 0.0
    %215 = vmatpush2.msra.mxu0 0.0
    %216 = vmatprep.subr.mxu0 0.0
    %217 = vmatpush2.msra.mxu0 0.0
    %218 = vmatprep.subr.mxu0 0.0
    %219 = vmatpush2.msra.mxu0 0.0
    %220 = vmatprep.subr.mxu0 0.0
    %221 = vmatpush2.msra.mxu0 0.0
    %222 = vmatprep.subr.mxu0 0.0
    %223 = vmatpush2.msra.mxu0 0.0
    %224 = vmatprep.subr.mxu0 0.0
    %225 = vmatpush2.msra.mxu0 0.0
    %226 = vmatprep.subr.mxu0 0.0
    %227 = vmatpush2.msra.mxu0 0.0
    %228 = vmatprep.subr.mxu0 0.0
    %229 = vmatpush2.msra.mxu0 0.0
    %230 = vmatprep.subr.mxu0 0.0
    %231 = vmatpush2.msra.mxu0 0.0
    %232 = vmatprep.subr.mxu0 0.0
    %233 = vmatpush2.msra.mxu0 0.0
    %234 = vmatprep.subr.mxu0 0.0
    %235 = vmatpush2.msra.mxu0 0.0
    %236 = vmatprep.mubr.f32.mxu0 0.0
    %237 = vmatmul.mubr.f32.gmra.mxu0 %v170
    %v238 = vpop.f32.mrf.mxu0
    %v239 = vadd.f32 0.0, %v238
    %v240 = vpop.f32.mrf.mxu0
    %241 = vdwg.mxu0
    %vm242 = vcmask 392192
    %v243 = vsel %vm242, %v239, 0.0
    %v244 = vrot.slane %v243, 4
    %v245 = vadd.f32 %v243, %v244
    %v246 = vrot.slane %v245, 2
    %v247 = vadd.f32 %v245, %v246
    %v248 = vrot.slane %v247, 1
    %v249 = vadd.f32 %v247, %v248
    %v250 = vmul.f32 %v249, %v129
    %v251 = vsub.f32 %v239, %v250
    %v252 = vmul.f32 %v251, %v251
    %v253 = vsel %vm242, %v252, 0.0
    %v254 = vrot.slane %v253, 4
    %v255 = vadd.f32 %v253, %v254
    %v256 = vrot.slane %v255, 2
    %v257 = vadd.f32 %v255, %v256
    %v258 = vrot.slane %v257, 1
    %v259 = vadd.f32 %v257, %v258
    %v260 = vmul.f32 %v259, %v129
    %v261 = vld [vmem:[%s5] sm:$0x1]
    %v262 = vadd.f32 %v260, 1e-05
    %v263 = vrsqrt.pop %v262
    %v264 = vmul.f32 %v261, %v263
    %v266 = vlaneseq
    %v267 = vshrl.u32 %v266, 7
    %v268 = vsub.s32 0, %v267
    %v269 = vrot.slane %v264, %v268
    %v271 = vmul.f32 %v251, %v269
    %v272 = vld [vmem:[%s6] sm:$0x1]
    %v274 = vlaneseq
    %v275 = vshrl.u32 %v274, 7
    %v276 = vsub.s32 0, %v275
    %v277 = vrot.slane %v272, %v276
    %v279 = vadd.f32 %v271, %v277
    %v280 = vmax.f32 %v279, 0.0
    %v281 = vld [vmem:[%s7] sm:$0xff]
    %v282 = vld [vmem:[%s7 + $0x8] sm:$0xff]
    %v283 = vld [vmem:[%s7 + $0x10] sm:$0xff]
    %v284 = vld [vmem:[%s7 + $0x18] sm:$0xff]
    %v285 = vld [vmem:[%s7 + $0x20] sm:$0xff]
    %v286 = vld [vmem:[%s7 + $0x28] sm:$0xff]
    %v288 = vsel %vm242, %v280, 0
    %290 = vmatprep.subr.mxu0 0.0
    %291 = vmatpush1.msra.mxu0 0.0
    %292 = vmatprep.subr.mxu0 0.0
    %293 = vmatpush1.msra.mxu0 0.0
    %294 = vmatprep.subr.mxu0 0.0
    %295 = vmatpush1.msra.mxu0 0.0
    %296 = vmatprep.subr.mxu0 0.0
    %297 = vmatpush1.msra.mxu0 0.0
    %298 = vmatprep.subr.mxu0 0.0
    %299 = vmatpush1.msra.mxu0 0.0
    %300 = vmatprep.subr.mxu0 0.0
    %301 = vmatpush1.msra.mxu0 0.0
    %302 = vmatprep.subr.mxu0 0.0
    %303 = vmatpush1.msra.mxu0 0.0
    %304 = vmatprep.subr.mxu0 0.0
    %305 = vmatpush1.msra.mxu0 0.0
    %306 = vmatprep.subr.mxu0 0.0
    %307 = vmatpush1.msra.mxu0 0.0
    %308 = vmatprep.subr.mxu0 0.0
    %309 = vmatpush1.msra.mxu0 0.0
    %310 = vmatprep.subr.mxu0 0.0
    %311 = vmatpush1.msra.mxu0 %v286
    %312 = vmatprep.subr.mxu0 0.0
    %313 = vmatpush1.msra.mxu0 %v285
    %314 = vmatprep.subr.mxu0 0.0
    %315 = vmatpush1.msra.mxu0 %v284
    %316 = vmatprep.subr.mxu0 0.0
    %317 = vmatpush1.msra.mxu0 %v283
    %318 = vmatprep.subr.mxu0 0.0
    %319 = vmatpush1.msra.mxu0 %v282
    %320 = vmatprep.subr.mxu0 0.0
    %321 = vmatpush1.msra.mxu0 %v281
    %322 = vmatprep.subr.mxu0 0.0
    %323 = vmatpush2.msra.mxu0 0.0
    %324 = vmatprep.subr.mxu0 0.0
    %325 = vmatpush2.msra.mxu0 0.0
    %326 = vmatprep.subr.mxu0 0.0
    %327 = vmatpush2.msra.mxu0 0.0
    %328 = vmatprep.subr.mxu0 0.0
    %329 = vmatpush2.msra.mxu0 0.0
    %330 = vmatprep.subr.mxu0 0.0
    %331 = vmatpush2.msra.mxu0 0.0
    %332 = vmatprep.subr.mxu0 0.0
    %333 = vmatpush2.msra.mxu0 0.0
    %334 = vmatprep.subr.mxu0 0.0
    %335 = vmatpush2.msra.mxu0 0.0
    %336 = vmatprep.subr.mxu0 0.0
    %337 = vmatpush2.msra.mxu0 0.0
    %338 = vmatprep.subr.mxu0 0.0
    %339 = vmatpush2.msra.mxu0 0.0
    %340 = vmatprep.subr.mxu0 0.0
    %341 = vmatpush2.msra.mxu0 0.0
    %342 = vmatprep.subr.mxu0 0.0
    %343 = vmatpush2.msra.mxu0 0.0
    %344 = vmatprep.subr.mxu0 0.0
    %345 = vmatpush2.msra.mxu0 0.0
    %346 = vmatprep.subr.mxu0 0.0
    %347 = vmatpush2.msra.mxu0 0.0
    %348 = vmatprep.subr.mxu0 0.0
    %349 = vmatpush2.msra.mxu0 0.0
    %350 = vmatprep.subr.mxu0 0.0
    %351 = vmatpush2.msra.mxu0 0.0
    %352 = vmatprep.subr.mxu0 0.0
    %353 = vmatpush2.msra.mxu0 0.0
    %354 = vmatprep.mubr.f32.mxu0 0.0
    %355 = vmatmul.mubr.f32.gmra.mxu0 %v288
    %v356 = vpop.f32.mrf.mxu0
    %v357 = vadd.f32 0.0, %v356
    %v358 = vpop.f32.mrf.mxu0
    %359 = vdwg.mxu0
    %v360 = vsel %vm47, %v357, 0.0
    %v361 = vrot.slane %v360, 4
    %v362 = vadd.f32 %v360, %v361
    %v363 = vrot.slane %v362, 2
    %v364 = vadd.f32 %v362, %v363
    %v365 = vrot.slane %v364, 1
    %v366 = vadd.f32 %v364, %v365
    %v367 = vmul.f32 %v366, %v129
    %v368 = vsub.f32 %v357, %v367
    %v369 = vmul.f32 %v368, %v368
    %v370 = vsel %vm47, %v369, 0.0
    %v371 = vrot.slane %v370, 4
    %v372 = vadd.f32 %v370, %v371
    %v373 = vrot.slane %v372, 2
    %v374 = vadd.f32 %v372, %v373
    %v375 = vrot.slane %v374, 1
    %v376 = vadd.f32 %v374, %v375
    %v377 = vmul.f32 %v376, %v129
    %v378 = vld [vmem:[%s8] sm:$0x1]
    %v379 = vadd.f32 %v377, 1e-05
    %v380 = vrsqrt.pop %v379
    %v381 = vmul.f32 %v378, %v380
    %v383 = vlaneseq
    %v384 = vshrl.u32 %v383, 7
    %v385 = vsub.s32 0, %v384
    %v386 = vrot.slane %v381, %v385
    %v388 = vmul.f32 %v368, %v386
    %v389 = vld [vmem:[%s9] sm:$0x1]
    %v391 = vlaneseq
    %v392 = vshrl.u32 %v391, 7
    %v393 = vsub.s32 0, %v392
    %v394 = vrot.slane %v389, %v393
    %v396 = vadd.f32 %v388, %v394
    %v397 = vmax.f32 %v396, 0.0
    %v398 = vld [vmem:[%s10] sm:$0xff]
    %v399 = vld [vmem:[%s10 + $0x8] sm:$0xff]
    %v400 = vld [vmem:[%s10 + $0x10] sm:$0xff]
    %v401 = vld [vmem:[%s10 + $0x18] sm:$0xff]
    %v402 = vld [vmem:[%s11] sm:$0x1]
    %v404 = vlaneseq
    %v405 = vshrl.u32 %v404, 7
    %v406 = vsub.s32 0, %v405
    %v407 = vrot.slane %v402, %v406
    %v410 = vsel %vm47, %v397, 0
    %412 = vmatprep.subr.mxu0 0.0
    %413 = vmatpush1.msra.mxu0 0.0
    %414 = vmatprep.subr.mxu0 0.0
    %415 = vmatpush1.msra.mxu0 0.0
    %416 = vmatprep.subr.mxu0 0.0
    %417 = vmatpush1.msra.mxu0 0.0
    %418 = vmatprep.subr.mxu0 0.0
    %419 = vmatpush1.msra.mxu0 0.0
    %420 = vmatprep.subr.mxu0 0.0
    %421 = vmatpush1.msra.mxu0 0.0
    %422 = vmatprep.subr.mxu0 0.0
    %423 = vmatpush1.msra.mxu0 0.0
    %424 = vmatprep.subr.mxu0 0.0
    %425 = vmatpush1.msra.mxu0 0.0
    %426 = vmatprep.subr.mxu0 0.0
    %427 = vmatpush1.msra.mxu0 0.0
    %428 = vmatprep.subr.mxu0 0.0
    %429 = vmatpush1.msra.mxu0 0.0
    %430 = vmatprep.subr.mxu0 0.0
    %431 = vmatpush1.msra.mxu0 0.0
    %432 = vmatprep.subr.mxu0 0.0
    %433 = vmatpush1.msra.mxu0 0.0
    %434 = vmatprep.subr.mxu0 0.0
    %435 = vmatpush1.msra.mxu0 0.0
    %436 = vmatprep.subr.mxu0 0.0
    %437 = vmatpush1.msra.mxu0 %v401
    %438 = vmatprep.subr.mxu0 0.0
    %439 = vmatpush1.msra.mxu0 %v400
    %440 = vmatprep.subr.mxu0 0.0
    %441 = vmatpush1.msra.mxu0 %v399
    %442 = vmatprep.subr.mxu0 0.0
    %443 = vmatpush1.msra.mxu0 %v398
    %444 = vmatprep.subr.mxu0 0.0
    %445 = vmatpush2.msra.mxu0 0.0
    %446 = vmatprep.subr.mxu0 0.0
    %447 = vmatpush2.msra.mxu0 0.0
    %448 = vmatprep.subr.mxu0 0.0
    %449 = vmatpush2.msra.mxu0 0.0
    %450 = vmatprep.subr.mxu0 0.0
    %451 = vmatpush2.msra.mxu0 0.0
    %452 = vmatprep.subr.mxu0 0.0
    %453 = vmatpush2.msra.mxu0 0.0
    %454 = vmatprep.subr.mxu0 0.0
    %455 = vmatpush2.msra.mxu0 0.0
    %456 = vmatprep.subr.mxu0 0.0
    %457 = vmatpush2.msra.mxu0 0.0
    %458 = vmatprep.subr.mxu0 0.0
    %459 = vmatpush2.msra.mxu0 0.0
    %460 = vmatprep.subr.mxu0 0.0
    %461 = vmatpush2.msra.mxu0 0.0
    %462 = vmatprep.subr.mxu0 0.0
    %463 = vmatpush2.msra.mxu0 0.0
    %464 = vmatprep.subr.mxu0 0.0
    %465 = vmatpush2.msra.mxu0 0.0
    %466 = vmatprep.subr.mxu0 0.0
    %467 = vmatpush2.msra.mxu0 0.0
    %468 = vmatprep.subr.mxu0 0.0
    %469 = vmatpush2.msra.mxu0 0.0
    %470 = vmatprep.subr.mxu0 0.0
    %471 = vmatpush2.msra.mxu0 0.0
    %472 = vmatprep.subr.mxu0 0.0
    %473 = vmatpush2.msra.mxu0 0.0
    %474 = vmatprep.subr.mxu0 0.0
    %475 = vmatpush2.msra.mxu0 0.0
    %476 = vmatprep.mubr.f32.mxu0 0.0
    %477 = vmatmul.mubr.f32.gmra.mxu0 %v410
    %v478 = vpop.f32.mrf.mxu0
    %v479 = vadd.f32 %v407, %v478
    %v480 = vpop.f32.mrf.mxu0
    %481 = vdwg.mxu0
    %v482 = vmax.f32 %v479, 0.0
    %483 = vst [vmem:[#allocation2] sm:$0xff] %v482
    // Predicated region
    $region50: #{tpu_custom_call.1} parent=1 // pred_check
      _
    $region51: #{tpu_custom_call.1} parent=1 // pred_check_branch
      %485 = sbr.rel (0) target = $region53
    $region52: #{tpu_custom_call.1} parent=1 // pred_region
      %s487 = ssub.s32 128, 128
      %488 = vsyncadd [#allocation3], %s487
      %s490 = sshll.u32 [#allocation2], 4
      %s491 = int_to_ptr.vmem [resolvable:$true] %s490
      %493 = dma.vmem_to_hbm [thread:$0]  %s491, 128, %s12, [#allocation3]
    $region53: #{tpu_custom_call.1} parent=1 // pred_fallthru
      _
    // Predicated region
    $region54: #{tpu_custom_call.1} parent=1 // pred_check
      _
    $region55: #{tpu_custom_call.1} parent=1 // pred_check_branch
      %495 = sbr.rel (0) target = $region57
    $region56: #{tpu_custom_call.1} parent=1 // pred_region
      %496 = dma.done [#allocation3], 128
    $region57: #{tpu_custom_call.1} parent=1 // pred_fallthru
      _
    %497 = vsyncpa [#allocation3], 1

</llo_original>
